<compile_context>
chip_gen: v7x
topology: tpu7x:2x2x1
jax: 0.10.0
libtpu: 0.0.40
codegen_flags: <defaults>
</compile_context>

<pallas_src>
import math
from functools import partial

import jax
import jax.numpy as jnp
from jax.experimental import pallas as pl
from jax.experimental.pallas import tpu as pltpu


def _fused_attn_kernel(x_ref, wq_ref, wk_ref, wv_ref, bq_ref, bk_ref, bv_ref,
                       o_ref, *, depth, num_heads):
    """One grid step = one batch element: qkv projection + all heads' attention.

    x_ref : (S, depth) f32 rows of this batch element.
    w*_ref: (depth, depth) f32 per-projection weights (pre-split in the wrapper so
            q/k/v each start at lane 0 -- no lane-offset extracts of a fused qkv).
    b*_ref: (1, depth) f32 biases.
    o_ref : (S, depth) f32; columns [h*dh:(h+1)*dh] hold head h (lane-dense layout,
            torch flatten order recovered wrapper-side).
    """
    dh = depth // num_heads
    # Faithful to the reference: v2 = v1.div(dh ** -0.5)  ==  v1 * sqrt(dh).
    inv_scale_factor = float(dh) ** (-0.5)
    q_scale = jnp.float32(1.0 / inv_scale_factor)

    # bf16 MXU operands, f32 accumulation (deliberate deviation from pure f32).
    x_bf = x_ref[...].astype(jnp.bfloat16)                         # (S, depth)

    def proj(w_ref, b_ref):
        return jnp.dot(x_bf, w_ref[...].astype(jnp.bfloat16),
                       preferred_element_type=jnp.float32) + b_ref[...]

    # Scale folded into q (S*depth multiplies instead of S*S divides per head).
    q = (proj(wq_ref, bq_ref) * q_scale).astype(jnp.bfloat16)      # (S, depth)
    k = proj(wk_ref, bk_ref).astype(jnp.bfloat16)                  # (S, depth)
    v = proj(wv_ref, bv_ref).astype(jnp.bfloat16)                  # (S, depth)

    # Static unroll over heads; per-head slices are static lane extracts.
    head_outs = []
    for h in range(num_heads):
        lo, hi = h * dh, (h + 1) * dh
        qh, kh, vh = q[:, lo:hi], k[:, lo:hi], v[:, lo:hi]         # (S, dh) each

        # q @ k^T as an "nt" contraction (no materialized transpose).
        s = jnp.einsum("qd,kd->qk", qh, kh,
                       preferred_element_type=jnp.float32)         # (S, S)

        # Numerically-stable softmax; normalization deferred to after PV.
        # NOTE: at S=8 the softmax axis is padded to 128 lanes; keep S a multiple
        # of 128 (or pack heads into lanes) if this is ever scaled up.
        m = jnp.max(s, axis=-1, keepdims=True)                     # (S, 1)
        e = jnp.exp(s - m)                                         # (S, S)
        denom = jnp.sum(e, axis=-1, keepdims=True)                 # (S, 1)

        # TODO(synk): dropout_p is an undefined global in the reference module;
        # dropout is a no-op (p = 0).

        pv = jnp.einsum("qk,kd->qd", e.astype(jnp.bfloat16), vh,
                        preferred_element_type=jnp.float32)        # (S, dh)
        head_outs.append(pv * pl.reciprocal(denom, approx=True))   # EUP reciprocal

    # All heads packed side-by-side along lanes -> one full-block, lane-dense store
    # (single contiguous writeback DMA, no per-head partial vst.msk).
    o_ref[...] = jnp.concatenate(head_outs, axis=-1).astype(o_ref.dtype)


def model_forward(x, w, b, mask, *, depth, num_heads):
    """x: (B, S, depth) f32, w: (depth, 3*depth), b: (3*depth,) -> (B, H*S*dh) f32."""
    B, S, D = x.shape
    assert D == depth
    dh = depth // num_heads
    del mask  # expanded-but-never-applied in the reference forward

    x2d = x.reshape(B * S, depth)

    # Pre-split the fused qkv parameters so each projection starts at lane 0.
    wq, wk, wv = (w[:, i * depth:(i + 1) * depth] for i in range(3))
    bq, bk, bv = (b[i * depth:(i + 1) * depth].reshape(1, depth) for i in range(3))

    kernel = partial(_fused_attn_kernel, depth=depth, num_heads=num_heads)

    flops = B * (3 * 2 * S * depth * depth + num_heads * 2 * (2 * S * S * dh))
    transcendentals = B * num_heads * S * S
    bytes_accessed = 4 * (2 * B * S * depth + 3 * depth * depth + 3 * depth)

    # grid=(B,) + "parallel": each batch element is an independent row-block, so
    # both v7x TensorCores get work; weights/biases have constant block indices and
    # are not re-fetched between steps.
    out2d = pl.pallas_call(
        kernel,
        out_shape=jax.ShapeDtypeStruct((B * S, depth), jnp.float32),
        grid=(B,),
        in_specs=[
            pl.BlockSpec((S, depth), lambda i: (i, 0)),        # x rows of batch i
            pl.BlockSpec((depth, depth), lambda i: (0, 0)),    # wq (resident)
            pl.BlockSpec((depth, depth), lambda i: (0, 0)),    # wk
            pl.BlockSpec((depth, depth), lambda i: (0, 0)),    # wv
            pl.BlockSpec((1, depth), lambda i: (0, 0)),        # bq
            pl.BlockSpec((1, depth), lambda i: (0, 0)),        # bk
            pl.BlockSpec((1, depth), lambda i: (0, 0)),        # bv
        ],
        out_specs=pl.BlockSpec((S, depth), lambda i: (i, 0)),
        compiler_params=pltpu.CompilerParams(dimension_semantics=("parallel",)),
        cost_estimate=pl.CostEstimate(flops=flops,
                                      transcendentals=transcendentals,
                                      bytes_accessed=bytes_accessed),
    )(x2d, wq, wk, wv, bq, bk, bv)

    # (B*S, H*dh) -> (B, S, H, dh) -> (B, H, S, dh) -> torch.flatten(start_dim=1).
    out = out2d.reshape(B, S, num_heads, dh)
    return jnp.transpose(out, (0, 2, 1, 3)).reshape(B, -1)


def _reference_f32(x, w, b, *, depth, num_heads):
    """Pure-f32 JAX reference for the (intended) torch semantics."""
    B, S, _ = x.shape
    dh = depth // num_heads
    qkv = x @ w + b[None, None, :]
    q, k, v = jnp.split(qkv, 3, axis=-1)

    def split_heads(t):
        return jnp.transpose(t.reshape(B, S, num_heads, dh), (0, 2, 1, 3))

    q, k, v = split_heads(q), split_heads(k), split_heads(v)
    s = jnp.einsum("bhqd,bhkd->bhqk", q, k) / (dh ** (-0.5))
    p = jax.nn.softmax(s, axis=-1)
    o = jnp.einsum("bhqk,bhkd->bhqd", p, v)
    return o.reshape(B, -1)


def _reference_bf16_policy(x, w, b, *, depth, num_heads):
    """Plain-JAX mirror of the kernel's bf16-MXU-operand / f32-accumulation policy.

    Differs from the kernel only by accumulation order and the exact (vs approximate
    EUP) reciprocal -> tight structural check of the Pallas plumbing and layouts.
    """
    B, S, _ = x.shape
    dh = depth // num_heads
    f32, bf16 = jnp.float32, jnp.bfloat16
    rq = lambda t: t.astype(bf16).astype(f32)   # round-trip through bf16

    x2 = rq(x.reshape(B * S, depth))
    wq, wk, wv = (rq(w[:, i * depth:(i + 1) * depth]) for i in range(3))
    bq, bk, bv = (b[i * depth:(i + 1) * depth] for i in range(3))

    scale = jnp.float32(1.0 / (float(dh) ** (-0.5)))
    q = rq((x2 @ wq + bq) * scale)
    k = rq(x2 @ wk + bk)
    v = rq(x2 @ wv + bv)

    def split_heads(t):
        return jnp.transpose(t.reshape(B, S, num_heads, dh), (0, 2, 1, 3))

    q, k, v = split_heads(q), split_heads(k), split_heads(v)
    s = jnp.einsum("bhqd,bhkd->bhqk", q, k)
    m = jnp.max(s, axis=-1, keepdims=True)
    e = jnp.exp(s - m)
    denom = jnp.sum(e, axis=-1, keepdims=True)
    o = jnp.einsum("bhqk,bhkd->bhqd", rq(e), v) / denom
    return o.reshape(B, -1)


if __name__ == "__main__":
    depth = 32
    num_heads = 4
    B, S = 2, 8

    key = jax.random.PRNGKey(0)
    kx, kw, kb = jax.random.split(key, 3)

    x = jax.random.normal(kx, (B, S, depth), dtype=jnp.float32)
    # nn.Linear-style init: U(-1/sqrt(depth), 1/sqrt(depth)); stored as (in, out).
    bound = 1.0 / math.sqrt(depth)
    w = jax.random.uniform(kw, (depth, 3 * depth), jnp.float32, -bound, bound)
    b = jax.random.uniform(kb, (3 * depth,), jnp.float32, -bound, bound)
    mask = jnp.ones((1, 1, 1, 1), dtype=jnp.float32)

    out = jax.block_until_ready(
        model_forward(x, w, b, mask, depth=depth, num_heads=num_heads))
    assert out.shape == (B, num_heads * S * (depth // num_heads))

    # Tight structural check: same math as the kernel's bf16-operand policy computed
    # in plain JAX; only accumulation order and the approximate reciprocal differ.
    ref_bf16 = _reference_bf16_policy(x, w, b, depth=depth, num_heads=num_heads)
    assert jnp.allclose(out, ref_bf16, atol=1e-2, rtol=1e-2), "structural mismatch"

    # Loose bound vs the pure-f32 torch-faithful semantics: the bf16 MXU operands
    # (review-sanctioned deviation) are amplified through exp() because the reference
    # (faithfully) multiplies scores by sqrt(dh) instead of dividing.
    ref_f32 = _reference_f32(x, w, b, depth=depth, num_heads=num_heads)
    assert jnp.allclose(out, ref_f32, atol=1e-1, rtol=1e-1), "f32 deviation too large"

    print("KERNEL_OK")
</pallas_src>

<mosaic_0001>
module attributes {stable_mosaic.version = 11 : i64} {
  func.func @_fused_attn_kernel(%arg0: i32, %arg1: memref<8x32xf32, #tpu.memory_space<vmem>>, %arg2: memref<32x32xf32, #tpu.memory_space<vmem>>, %arg3: memref<32x32xf32, #tpu.memory_space<vmem>>, %arg4: memref<32x32xf32, #tpu.memory_space<vmem>>, %arg5: memref<1x32xf32, #tpu.memory_space<vmem>>, %arg6: memref<1x32xf32, #tpu.memory_space<vmem>>, %arg7: memref<1x32xf32, #tpu.memory_space<vmem>>, %arg8: memref<8x32xf32, #tpu.memory_space<vmem>>) attributes {dimension_semantics = [#tpu.dimension_semantics<parallel>], iteration_bounds = array<i64: 2>, scalar_prefetch = 0 : i64, scratch_operands = 0 : i64, tpu.core_type = #tpu.core_type<tc>, window_params = [{transform_indices = @transform_0, window_bounds = array<i64: 8, 32>}, {pipeline_mode = #tpu.pipeline_mode<synchronous>, transform_indices = @transform_1, window_bounds = array<i64: 32, 32>}, {pipeline_mode = #tpu.pipeline_mode<synchronous>, transform_indices = @transform_2, window_bounds = array<i64: 32, 32>}, {pipeline_mode = #tpu.pipeline_mode<synchronous>, transform_indices = @transform_3, window_bounds = array<i64: 32, 32>}, {pipeline_mode = #tpu.pipeline_mode<synchronous>, transform_indices = @transform_4, window_bounds = array<i64: 1, 32>}, {pipeline_mode = #tpu.pipeline_mode<synchronous>, transform_indices = @transform_5, window_bounds = array<i64: 1, 32>}, {pipeline_mode = #tpu.pipeline_mode<synchronous>, transform_indices = @transform_6, window_bounds = array<i64: 1, 32>}, {transform_indices = @transform_7, window_bounds = array<i64: 8, 32>}]} {
    %c0 = arith.constant 0 : index
    %c0_0 = arith.constant 0 : index
    %0 = vector.load %arg1[%c0, %c0_0] : memref<8x32xf32, #tpu.memory_space<vmem>>, vector<8x32xf32>
    %1 = arith.truncf %0 : vector<8x32xf32> to vector<8x32xbf16>
    %c0_1 = arith.constant 0 : index
    %c0_2 = arith.constant 0 : index
    %2 = vector.load %arg2[%c0_1, %c0_2] : memref<32x32xf32, #tpu.memory_space<vmem>>, vector<32x32xf32>
    %3 = arith.truncf %2 : vector<32x32xf32> to vector<32x32xbf16>
    %cst = arith.constant dense<0.000000e+00> : vector<8x32xf32>
    %4 = tpu.matmul %1, %3, %cst {dimension_numbers = #tpu.dot_dimension_numbers<[1], [0], [0], [1], [0, 0, 1, 1], [], []>} : vector<8x32xbf16>, vector<32x32xbf16>, vector<8x32xf32> -> vector<8x32xf32>
    %c0_3 = arith.constant 0 : index
    %c0_4 = arith.constant 0 : index
    %5 = vector.load %arg5[%c0_3, %c0_4] : memref<1x32xf32, #tpu.memory_space<vmem>>, vector<1x32xf32>
    %6 = vector.broadcast %5 : vector<1x32xf32> to vector<8x32xf32>
    %7 = arith.addf %4, %6 : vector<8x32xf32>
    %cst_5 = arith.constant 2.82842708 : f32
    %8 = vector.broadcast %cst_5 : f32 to vector<8x32xf32>
    %9 = arith.mulf %7, %8 : vector<8x32xf32>
    %10 = arith.truncf %9 : vector<8x32xf32> to vector<8x32xbf16>
    %c0_6 = arith.constant 0 : index
    %c0_7 = arith.constant 0 : index
    %11 = vector.load %arg3[%c0_6, %c0_7] : memref<32x32xf32, #tpu.memory_space<vmem>>, vector<32x32xf32>
    %12 = arith.truncf %11 : vector<32x32xf32> to vector<32x32xbf16>
    %cst_8 = arith.constant dense<0.000000e+00> : vector<8x32xf32>
    %13 = tpu.matmul %1, %12, %cst_8 {dimension_numbers = #tpu.dot_dimension_numbers<[1], [0], [0], [1], [0, 0, 1, 1], [], []>} : vector<8x32xbf16>, vector<32x32xbf16>, vector<8x32xf32> -> vector<8x32xf32>
    %c0_9 = arith.constant 0 : index
    %c0_10 = arith.constant 0 : index
    %14 = vector.load %arg6[%c0_9, %c0_10] : memref<1x32xf32, #tpu.memory_space<vmem>>, vector<1x32xf32>
    %15 = vector.broadcast %14 : vector<1x32xf32> to vector<8x32xf32>
    %16 = arith.addf %13, %15 : vector<8x32xf32>
    %17 = arith.truncf %16 : vector<8x32xf32> to vector<8x32xbf16>
    %c0_11 = arith.constant 0 : index
    %c0_12 = arith.constant 0 : index
    %18 = vector.load %arg4[%c0_11, %c0_12] : memref<32x32xf32, #tpu.memory_space<vmem>>, vector<32x32xf32>
    %19 = arith.truncf %18 : vector<32x32xf32> to vector<32x32xbf16>
    %cst_13 = arith.constant dense<0.000000e+00> : vector<8x32xf32>
    %20 = tpu.matmul %1, %19, %cst_13 {dimension_numbers = #tpu.dot_dimension_numbers<[1], [0], [0], [1], [0, 0, 1, 1], [], []>} : vector<8x32xbf16>, vector<32x32xbf16>, vector<8x32xf32> -> vector<8x32xf32>
    %c0_14 = arith.constant 0 : index
    %c0_15 = arith.constant 0 : index
    %21 = vector.load %arg7[%c0_14, %c0_15] : memref<1x32xf32, #tpu.memory_space<vmem>>, vector<1x32xf32>
    %22 = vector.broadcast %21 : vector<1x32xf32> to vector<8x32xf32>
    %23 = arith.addf %20, %22 : vector<8x32xf32>
    %24 = arith.truncf %23 : vector<8x32xf32> to vector<8x32xbf16>
    %25 = vector.extract_strided_slice %10 {offsets = [0, 0], sizes = [8, 8], strides = [1, 1]} : vector<8x32xbf16> to vector<8x8xbf16>
    %26 = vector.extract_strided_slice %17 {offsets = [0, 0], sizes = [8, 8], strides = [1, 1]} : vector<8x32xbf16> to vector<8x8xbf16>
    %27 = vector.extract_strided_slice %24 {offsets = [0, 0], sizes = [8, 8], strides = [1, 1]} : vector<8x32xbf16> to vector<8x8xbf16>
    "tpu.trace_start"() <{level = 10 : i32, message = "qd,kd->qk"}> : () -> ()
    %cst_16 = arith.constant dense<0.000000e+00> : vector<8x8xf32>
    %28 = tpu.matmul %25, %26, %cst_16 {dimension_numbers = #tpu.dot_dimension_numbers<[1], [1], [0], [0], [0, 0, 1, 0], [], []>} : vector<8x8xbf16>, vector<8x8xbf16>, vector<8x8xf32> -> vector<8x8xf32>
    "tpu.trace_stop"() : () -> ()
    %cst_17 = arith.constant dense<0xFF800000> : vector<8xf32>
    %29 = vector.multi_reduction <maximumf>, %28, %cst_17 [1] : vector<8x8xf32> to vector<8xf32>
    %30 = vector.shape_cast %29 : vector<8xf32> to vector<8x1xf32>
    %31 = vector.broadcast %30 : vector<8x1xf32> to vector<8x8xf32>
    %32 = arith.subf %28, %31 : vector<8x8xf32>
    %33 = math.exp %32 : vector<8x8xf32>
    %cst_18 = arith.constant dense<0.000000e+00> : vector<8xf32>
    %34 = vector.multi_reduction <add>, %33, %cst_18 [1] : vector<8x8xf32> to vector<8xf32>
    %35 = vector.shape_cast %34 : vector<8xf32> to vector<8x1xf32>
    %36 = arith.truncf %33 : vector<8x8xf32> to vector<8x8xbf16>
    "tpu.trace_start"() <{level = 10 : i32, message = "qk,kd->qd"}> : () -> ()
    %cst_19 = arith.constant dense<0.000000e+00> : vector<8x8xf32>
    %37 = tpu.matmul %36, %27, %cst_19 {dimension_numbers = #tpu.dot_dimension_numbers<[1], [0], [0], [1], [0, 0, 1, 1], [], []>} : vector<8x8xbf16>, vector<8x8xbf16>, vector<8x8xf32> -> vector<8x8xf32>
    "tpu.trace_stop"() : () -> ()
    %38 = tpu.reciprocal %35 {approx = true} : vector<8x1xf32> -> vector<8x1xf32>
    %39 = vector.broadcast %38 : vector<8x1xf32> to vector<8x8xf32>
    %40 = arith.mulf %37, %39 : vector<8x8xf32>
    %41 = vector.extract_strided_slice %10 {offsets = [0, 8], sizes = [8, 8], strides = [1, 1]} : vector<8x32xbf16> to vector<8x8xbf16>
    %42 = vector.extract_strided_slice %17 {offsets = [0, 8], sizes = [8, 8], strides = [1, 1]} : vector<8x32xbf16> to vector<8x8xbf16>
    %43 = vector.extract_strided_slice %24 {offsets = [0, 8], sizes = [8, 8], strides = [1, 1]} : vector<8x32xbf16> to vector<8x8xbf16>
    "tpu.trace_start"() <{level = 10 : i32, message = "qd,kd->qk"}> : () -> ()
    %cst_20 = arith.constant dense<0.000000e+00> : vector<8x8xf32>
    %44 = tpu.matmul %41, %42, %cst_20 {dimension_numbers = #tpu.dot_dimension_numbers<[1], [1], [0], [0], [0, 0, 1, 0], [], []>} : vector<8x8xbf16>, vector<8x8xbf16>, vector<8x8xf32> -> vector<8x8xf32>
    "tpu.trace_stop"() : () -> ()
    %cst_21 = arith.constant dense<0xFF800000> : vector<8xf32>
    %45 = vector.multi_reduction <maximumf>, %44, %cst_21 [1] : vector<8x8xf32> to vector<8xf32>
    %46 = vector.shape_cast %45 : vector<8xf32> to vector<8x1xf32>
    %47 = vector.broadcast %46 : vector<8x1xf32> to vector<8x8xf32>
    %48 = arith.subf %44, %47 : vector<8x8xf32>
    %49 = math.exp %48 : vector<8x8xf32>
    %cst_22 = arith.constant dense<0.000000e+00> : vector<8xf32>
    %50 = vector.multi_reduction <add>, %49, %cst_22 [1] : vector<8x8xf32> to vector<8xf32>
    %51 = vector.shape_cast %50 : vector<8xf32> to vector<8x1xf32>
    %52 = arith.truncf %49 : vector<8x8xf32> to vector<8x8xbf16>
    "tpu.trace_start"() <{level = 10 : i32, message = "qk,kd->qd"}> : () -> ()
    %cst_23 = arith.constant dense<0.000000e+00> : vector<8x8xf32>
    %53 = tpu.matmul %52, %43, %cst_23 {dimension_numbers = #tpu.dot_dimension_numbers<[1], [0], [0], [1], [0, 0, 1, 1], [], []>} : vector<8x8xbf16>, vector<8x8xbf16>, vector<8x8xf32> -> vector<8x8xf32>
    "tpu.trace_stop"() : () -> ()
    %54 = tpu.reciprocal %51 {approx = true} : vector<8x1xf32> -> vector<8x1xf32>
    %55 = vector.broadcast %54 : vector<8x1xf32> to vector<8x8xf32>
    %56 = arith.mulf %53, %55 : vector<8x8xf32>
    %57 = vector.extract_strided_slice %10 {offsets = [0, 16], sizes = [8, 8], strides = [1, 1]} : vector<8x32xbf16> to vector<8x8xbf16>
    %58 = vector.extract_strided_slice %17 {offsets = [0, 16], sizes = [8, 8], strides = [1, 1]} : vector<8x32xbf16> to vector<8x8xbf16>
    %59 = vector.extract_strided_slice %24 {offsets = [0, 16], sizes = [8, 8], strides = [1, 1]} : vector<8x32xbf16> to vector<8x8xbf16>
    "tpu.trace_start"() <{level = 10 : i32, message = "qd,kd->qk"}> : () -> ()
    %cst_24 = arith.constant dense<0.000000e+00> : vector<8x8xf32>
    %60 = tpu.matmul %57, %58, %cst_24 {dimension_numbers = #tpu.dot_dimension_numbers<[1], [1], [0], [0], [0, 0, 1, 0], [], []>} : vector<8x8xbf16>, vector<8x8xbf16>, vector<8x8xf32> -> vector<8x8xf32>
    "tpu.trace_stop"() : () -> ()
    %cst_25 = arith.constant dense<0xFF800000> : vector<8xf32>
    %61 = vector.multi_reduction <maximumf>, %60, %cst_25 [1] : vector<8x8xf32> to vector<8xf32>
    %62 = vector.shape_cast %61 : vector<8xf32> to vector<8x1xf32>
    %63 = vector.broadcast %62 : vector<8x1xf32> to vector<8x8xf32>
    %64 = arith.subf %60, %63 : vector<8x8xf32>
    %65 = math.exp %64 : vector<8x8xf32>
    %cst_26 = arith.constant dense<0.000000e+00> : vector<8xf32>
    %66 = vector.multi_reduction <add>, %65, %cst_26 [1] : vector<8x8xf32> to vector<8xf32>
    %67 = vector.shape_cast %66 : vector<8xf32> to vector<8x1xf32>
    %68 = arith.truncf %65 : vector<8x8xf32> to vector<8x8xbf16>
    "tpu.trace_start"() <{level = 10 : i32, message = "qk,kd->qd"}> : () -> ()
    %cst_27 = arith.constant dense<0.000000e+00> : vector<8x8xf32>
    %69 = tpu.matmul %68, %59, %cst_27 {dimension_numbers = #tpu.dot_dimension_numbers<[1], [0], [0], [1], [0, 0, 1, 1], [], []>} : vector<8x8xbf16>, vector<8x8xbf16>, vector<8x8xf32> -> vector<8x8xf32>
    "tpu.trace_stop"() : () -> ()
    %70 = tpu.reciprocal %67 {approx = true} : vector<8x1xf32> -> vector<8x1xf32>
    %71 = vector.broadcast %70 : vector<8x1xf32> to vector<8x8xf32>
    %72 = arith.mulf %69, %71 : vector<8x8xf32>
    %73 = vector.extract_strided_slice %10 {offsets = [0, 24], sizes = [8, 8], strides = [1, 1]} : vector<8x32xbf16> to vector<8x8xbf16>
    %74 = vector.extract_strided_slice %17 {offsets = [0, 24], sizes = [8, 8], strides = [1, 1]} : vector<8x32xbf16> to vector<8x8xbf16>
    %75 = vector.extract_strided_slice %24 {offsets = [0, 24], sizes = [8, 8], strides = [1, 1]} : vector<8x32xbf16> to vector<8x8xbf16>
    "tpu.trace_start"() <{level = 10 : i32, message = "qd,kd->qk"}> : () -> ()
    %cst_28 = arith.constant dense<0.000000e+00> : vector<8x8xf32>
    %76 = tpu.matmul %73, %74, %cst_28 {dimension_numbers = #tpu.dot_dimension_numbers<[1], [1], [0], [0], [0, 0, 1, 0], [], []>} : vector<8x8xbf16>, vector<8x8xbf16>, vector<8x8xf32> -> vector<8x8xf32>
    "tpu.trace_stop"() : () -> ()
    %cst_29 = arith.constant dense<0xFF800000> : vector<8xf32>
    %77 = vector.multi_reduction <maximumf>, %76, %cst_29 [1] : vector<8x8xf32> to vector<8xf32>
    %78 = vector.shape_cast %77 : vector<8xf32> to vector<8x1xf32>
    %79 = vector.broadcast %78 : vector<8x1xf32> to vector<8x8xf32>
    %80 = arith.subf %76, %79 : vector<8x8xf32>
    %81 = math.exp %80 : vector<8x8xf32>
    %cst_30 = arith.constant dense<0.000000e+00> : vector<8xf32>
    %82 = vector.multi_reduction <add>, %81, %cst_30 [1] : vector<8x8xf32> to vector<8xf32>
    %83 = vector.shape_cast %82 : vector<8xf32> to vector<8x1xf32>
    %84 = arith.truncf %81 : vector<8x8xf32> to vector<8x8xbf16>
    "tpu.trace_start"() <{level = 10 : i32, message = "qk,kd->qd"}> : () -> ()
    %cst_31 = arith.constant dense<0.000000e+00> : vector<8x8xf32>
    %85 = tpu.matmul %84, %75, %cst_31 {dimension_numbers = #tpu.dot_dimension_numbers<[1], [0], [0], [1], [0, 0, 1, 1], [], []>} : vector<8x8xbf16>, vector<8x8xbf16>, vector<8x8xf32> -> vector<8x8xf32>
    "tpu.trace_stop"() : () -> ()
    %86 = tpu.reciprocal %83 {approx = true} : vector<8x1xf32> -> vector<8x1xf32>
    %87 = vector.broadcast %86 : vector<8x1xf32> to vector<8x8xf32>
    %88 = arith.mulf %85, %87 : vector<8x8xf32>
    %89 = tpu.concatenate %40, %56, %72, %88 in 1 : vector<8x8xf32>, vector<8x8xf32>, vector<8x8xf32>, vector<8x8xf32> -> vector<8x32xf32>
    %c0_32 = arith.constant 0 : index
    %c0_33 = arith.constant 0 : index
    %90 = vector.load %arg8[%c0_32, %c0_33] : memref<8x32xf32, #tpu.memory_space<vmem>>, vector<8x32xf32>
    tpu.vector_store %arg8[%c0_32, %c0_33], %89 {strides = array<i32>} : memref<8x32xf32, #tpu.memory_space<vmem>>, vector<8x32xf32>,
    return
  }
  func.func @transform_0(%arg0: i32) -> (i32, i32) {
    %c0_i32 = arith.constant 0 : i32
    %c0_i32_0 = arith.constant 0 : i32
    return %arg0, %c0_i32 : i32, i32
  }
  func.func @transform_1(%arg0: i32) -> (i32, i32) {
    %c0_i32 = arith.constant 0 : i32
    %c0_i32_0 = arith.constant 0 : i32
    %c0_i32_1 = arith.constant 0 : i32
    return %c0_i32, %c0_i32_0 : i32, i32
  }
  func.func @transform_2(%arg0: i32) -> (i32, i32) {
    %c0_i32 = arith.constant 0 : i32
    %c0_i32_0 = arith.constant 0 : i32
    %c0_i32_1 = arith.constant 0 : i32
    return %c0_i32, %c0_i32_0 : i32, i32
  }
  func.func @transform_3(%arg0: i32) -> (i32, i32) {
    %c0_i32 = arith.constant 0 : i32
    %c0_i32_0 = arith.constant 0 : i32
    %c0_i32_1 = arith.constant 0 : i32
    return %c0_i32, %c0_i32_0 : i32, i32
  }
  func.func @transform_4(%arg0: i32) -> (i32, i32) {
    %c0_i32 = arith.constant 0 : i32
    %c0_i32_0 = arith.constant 0 : i32
    %c0_i32_1 = arith.constant 0 : i32
    return %c0_i32, %c0_i32_0 : i32, i32
  }
  func.func @transform_5(%arg0: i32) -> (i32, i32) {
    %c0_i32 = arith.constant 0 : i32
    %c0_i32_0 = arith.constant 0 : i32
    %c0_i32_1 = arith.constant 0 : i32
    return %c0_i32, %c0_i32_0 : i32, i32
  }
  func.func @transform_6(%arg0: i32) -> (i32, i32) {
    %c0_i32 = arith.constant 0 : i32
    %c0_i32_0 = arith.constant 0 : i32
    %c0_i32_1 = arith.constant 0 : i32
    return %c0_i32, %c0_i32_0 : i32, i32
  }
  func.func @transform_7(%arg0: i32) -> (i32, i32) {
    %c0_i32 = arith.constant 0 : i32
    %c0_i32_0 = arith.constant 0 : i32
    return %arg0, %c0_i32 : i32, i32
  }
}

</mosaic_0001>

<llo_original>
// kernel: tpu_custom_call.1
$region0: #{tpu_custom_call.1}
  #allocation0 [shape = 'u32[]', space=smem, size = 0x4, offset = 0x4, fixed_abs, tag = 'smem constant byte address 0x4 - core index']
  #allocation1 [shape = 'u32[144,128]{1,0:T(1,128)}', space=vmem, size = 0x12000, scoped, tag = 'internal scratch']
  %s0 = inlined_call_operand.hbm [shape: f32[16,32], index: 0, kind: input, shape index: {}]
  %s1 = inlined_call_operand.hbm [shape: f32[32,32], index: 1, kind: input, shape index: {}]
  %s2 = inlined_call_operand.hbm [shape: f32[32,32], index: 2, kind: input, shape index: {}]
  %s3 = inlined_call_operand.hbm [shape: f32[32,32], index: 3, kind: input, shape index: {}]
  %s4 = inlined_call_operand.vmem [shape: f32[1,32], index: 4, kind: input, shape index: {}]
  %s5 = inlined_call_operand.vmem [shape: f32[1,32], index: 5, kind: input, shape index: {}]
  %s6 = inlined_call_operand.vmem [shape: f32[1,32], index: 6, kind: input, shape index: {}]
  %s7 = inlined_call_operand.hbm [shape: f32[16,32], index: 7, kind: output, shape index: {}]
  %s8 = sld [smem:[#allocation0]]
  $region77: #{tpu_custom_call.1} parent=0
    _
  %s10 = ssub.s32 1, %s8
  %s11 = scalar_select 0, %s10, %s8
  $region1: #{tpu_custom_call.1} parent=0
    #allocation2 [shape = 'u8[8192]{0}', space=vmem, size = 0x2000, scoped, tag = 'input window, operand 0']
    #allocation3 [shape = 's32[2]{0}', space=sflag, size = 0x8, scoped, tag = 'scoped memory for tpu_custom_call.1']
    #allocation4 [shape = 's32[2]{0}', space=sflag, size = 0x8, scoped, tag = 'scoped memory for tpu_custom_call.1']
    #allocation5 [shape = 'u8[16384]{0}', space=vmem, size = 0x4000, scoped, tag = 'input window, operand 1, single buffered']
    #allocation6 [shape = 's32[1]{0}', space=sflag, size = 0x4, scoped, tag = 'scoped memory for tpu_custom_call.1']
    #allocation7 [shape = 'u8[16384]{0}', space=vmem, size = 0x4000, scoped, tag = 'input window, operand 2, single buffered']
    #allocation8 [shape = 'u8[16384]{0}', space=vmem, size = 0x4000, scoped, tag = 'input window, operand 3, single buffered']
    #allocation9 [shape = 's32[1]{0}', space=sflag, size = 0x4, scoped, tag = 'scoped memory for tpu_custom_call.1']
    #allocation10 [shape = 'u8[8192]{0}', space=vmem, size = 0x2000, scoped, tag = 'output window, operand 0']
    %12 = vsyncpa [#allocation3], 0
    %s13 = scalar_lea.sflag [#allocation3], 1
    %14 = vsyncpa %s13, 0
    %15 = vsyncpa [#allocation6], 0
    %16 = vsyncpa [#allocation9], 0
    %17 = vsyncpa [#allocation4], 0
    %s18 = scalar_lea.sflag [#allocation4], 1
    %19 = vsyncpa %s18, 0
    loop: start=0, step=1, limit=4
    $region2: #{tpu_custom_call.1} parent=1 // loop_pre_header
      _
    $region3: #{tpu_custom_call.1} parent=1 // loop_header
      %s21 = sphi 0, %s25
      %p22 = scmp.ge.s32.totalorder %s21, 4
      %s31 = sphi 0, %s33
      %s34 = sphi 0, %s31
      %s35 = sphi 0, %s34
      %s51 = sphi 0, %s35
      %s55 = sphi 0, %s55
      %s57 = sphi 0, %s55
      %s58 = sphi 0, %s57
      %s72 = sphi 0, %s58
      %s76 = sphi 0, %s76
      %s78 = sphi 0, %s76
      %s79 = sphi 0, %s78
      %s93 = sphi 0, %s79
      %s97 = sphi 0, %s97
      %s99 = sphi 0, %s97
      %s100 = sphi 0, %s99
      %s114 = sphi 0, %s100
      %s118 = sphi 0, %s118
      %s120 = sphi 0, %s118
      %s121 = sphi 0, %s120
      %s135 = sphi 0, %s121
      %s139 = sphi 0, %s139
      %s141 = sphi 0, %s139
      %s142 = sphi 0, %s141
      %s156 = sphi 0, %s142
      %s160 = sphi 0, %s160
      %s162 = sphi 0, %s160
      %s163 = sphi 0, %s162
      %s177 = sphi 0, %s163
      %s183 = sphi 0, %s185
      %s186 = sphi 0, %s183
      %s187 = sphi 0, %s186
      %s203 = sphi 0, %s187
    $region4: #{tpu_custom_call.1} parent=1 // loop_header_branch
      %24 = sbr.rel (%p22) target = $region8
    $region5: #{tpu_custom_call.1} parent=1 // loop_body
      %s26 = ssub.s32 %s21, 1
      %s27 = ssub.s32 %s21, 2
      %s28 = sadd.s32 %s21, 1
      %s29 = ssub.s32 %s21, %s28
      %p30 = scmp.eq.s32.totalorder %s29, 0
      %s32 = sadd.s32 %s31, 1
      %s33 = scalar_select %p30, %s31, %s32
      %p36 = pneg %p30
      %p37 = scmp.eq.s32.totalorder %s21, 1
      %p38 = por %p36, %p37
      %p39 = scmp.ne.s32.totalorder %s31, %s34
      %p40 = scmp.eq.s32.totalorder %s21, 0
      %p41 = por %p39, %p40
      %p42 = scmp.ne.s32.totalorder %s31, %s34
      %p43 = scmp.eq.s32.totalorder %s26, 1
      %p44 = por %p42, %p43
      %p45 = scmp.ne.s32.totalorder %s34, %s35
      %p46 = scmp.eq.s32.totalorder %s26, 0
      %p47 = por %p45, %p46
      %p48 = scmp.ne.s32.totalorder %s34, %s35
      %p49 = scmp.eq.s32.totalorder %s27, 1
      %p50 = por %p48, %p49
      %p52 = scmp.ne.s32.totalorder %s35, %s51
      %p53 = scmp.eq.s32.totalorder %s27, 0
      %p54 = por %p52, %p53
      %s56 = sadd.s32 %s55, 1
      %p59 = scmp.eq.s32.totalorder %s21, 1
      %p60 = scmp.ne.s32.totalorder %s55, %s57
      %p61 = scmp.eq.s32.totalorder %s21, 0
      %p62 = por %p60, %p61
      %p63 = scmp.ne.s32.totalorder %s55, %s57
      %p64 = scmp.eq.s32.totalorder %s26, 1
      %p65 = por %p63, %p64
      %p66 = scmp.ne.s32.totalorder %s57, %s58
      %p67 = scmp.eq.s32.totalorder %s26, 0
      %p68 = por %p66, %p67
      %p69 = scmp.ne.s32.totalorder %s57, %s58
      %p70 = scmp.eq.s32.totalorder %s27, 1
      %p71 = por %p69, %p70
      %p73 = scmp.ne.s32.totalorder %s58, %s72
      %p74 = scmp.eq.s32.totalorder %s27, 0
      %p75 = por %p73, %p74
      %s77 = sadd.s32 %s76, 1
      %p80 = scmp.eq.s32.totalorder %s21, 1
      %p81 = scmp.ne.s32.totalorder %s76, %s78
      %p82 = scmp.eq.s32.totalorder %s21, 0
      %p83 = por %p81, %p82
      %p84 = scmp.ne.s32.totalorder %s76, %s78
      %p85 = scmp.eq.s32.totalorder %s26, 1
      %p86 = por %p84, %p85
      %p87 = scmp.ne.s32.totalorder %s78, %s79
      %p88 = scmp.eq.s32.totalorder %s26, 0
      %p89 = por %p87, %p88
      %p90 = scmp.ne.s32.totalorder %s78, %s79
      %p91 = scmp.eq.s32.totalorder %s27, 1
      %p92 = por %p90, %p91
      %p94 = scmp.ne.s32.totalorder %s79, %s93
      %p95 = scmp.eq.s32.totalorder %s27, 0
      %p96 = por %p94, %p95
      %s98 = sadd.s32 %s97, 1
      %p101 = scmp.eq.s32.totalorder %s21, 1
      %p102 = scmp.ne.s32.totalorder %s97, %s99
      %p103 = scmp.eq.s32.totalorder %s21, 0
      %p104 = por %p102, %p103
      %p105 = scmp.ne.s32.totalorder %s97, %s99
      %p106 = scmp.eq.s32.totalorder %s26, 1
      %p107 = por %p105, %p106
      %p108 = scmp.ne.s32.totalorder %s99, %s100
      %p109 = scmp.eq.s32.totalorder %s26, 0
      %p110 = por %p108, %p109
      %p111 = scmp.ne.s32.totalorder %s99, %s100
      %p112 = scmp.eq.s32.totalorder %s27, 1
      %p113 = por %p111, %p112
      %p115 = scmp.ne.s32.totalorder %s100, %s114
      %p116 = scmp.eq.s32.totalorder %s27, 0
      %p117 = por %p115, %p116
      %s119 = sadd.s32 %s118, 1
      %p122 = scmp.eq.s32.totalorder %s21, 1
      %p123 = scmp.ne.s32.totalorder %s118, %s120
      %p124 = scmp.eq.s32.totalorder %s21, 0
      %p125 = por %p123, %p124
      %p126 = scmp.ne.s32.totalorder %s118, %s120
      %p127 = scmp.eq.s32.totalorder %s26, 1
      %p128 = por %p126, %p127
      %p129 = scmp.ne.s32.totalorder %s120, %s121
      %p130 = scmp.eq.s32.totalorder %s26, 0
      %p131 = por %p129, %p130
      %p132 = scmp.ne.s32.totalorder %s120, %s121
      %p133 = scmp.eq.s32.totalorder %s27, 1
      %p134 = por %p132, %p133
      %p136 = scmp.ne.s32.totalorder %s121, %s135
      %p137 = scmp.eq.s32.totalorder %s27, 0
      %p138 = por %p136, %p137
      %s140 = sadd.s32 %s139, 1
      %p143 = scmp.eq.s32.totalorder %s21, 1
      %p144 = scmp.ne.s32.totalorder %s139, %s141
      %p145 = scmp.eq.s32.totalorder %s21, 0
      %p146 = por %p144, %p145
      %p147 = scmp.ne.s32.totalorder %s139, %s141
      %p148 = scmp.eq.s32.totalorder %s26, 1
      %p149 = por %p147, %p148
      %p150 = scmp.ne.s32.totalorder %s141, %s142
      %p151 = scmp.eq.s32.totalorder %s26, 0
      %p152 = por %p150, %p151
      %p153 = scmp.ne.s32.totalorder %s141, %s142
      %p154 = scmp.eq.s32.totalorder %s27, 1
      %p155 = por %p153, %p154
      %p157 = scmp.ne.s32.totalorder %s142, %s156
      %p158 = scmp.eq.s32.totalorder %s27, 0
      %p159 = por %p157, %p158
      %s161 = sadd.s32 %s160, 1
      %p164 = scmp.eq.s32.totalorder %s21, 1
      %p165 = scmp.ne.s32.totalorder %s160, %s162
      %p166 = scmp.eq.s32.totalorder %s21, 0
      %p167 = por %p165, %p166
      %p168 = scmp.ne.s32.totalorder %s160, %s162
      %p169 = scmp.eq.s32.totalorder %s26, 1
      %p170 = por %p168, %p169
      %p171 = scmp.ne.s32.totalorder %s162, %s163
      %p172 = scmp.eq.s32.totalorder %s26, 0
      %p173 = por %p171, %p172
      %p174 = scmp.ne.s32.totalorder %s162, %s163
      %p175 = scmp.eq.s32.totalorder %s27, 1
      %p176 = por %p174, %p175
      %p178 = scmp.ne.s32.totalorder %s163, %s177
      %p179 = scmp.eq.s32.totalorder %s27, 0
      %p180 = por %p178, %p179
      %s181 = ssub.s32 %s21, %s28
      %p182 = scmp.eq.s32.totalorder %s181, 0
      %s184 = sadd.s32 %s183, 1
      %s185 = scalar_select %p182, %s183, %s184
      %p188 = pneg %p182
      %p189 = scmp.eq.s32.totalorder %s21, 1
      %p190 = por %p188, %p189
      %p191 = scmp.ne.s32.totalorder %s183, %s186
      %p192 = scmp.eq.s32.totalorder %s21, 0
      %p193 = por %p191, %p192
      %p194 = scmp.ne.s32.totalorder %s183, %s186
      %p195 = scmp.eq.s32.totalorder %s26, 1
      %p196 = por %p194, %p195
      %p197 = scmp.ne.s32.totalorder %s186, %s187
      %p198 = scmp.eq.s32.totalorder %s26, 0
      %p199 = por %p197, %p198
      %p200 = scmp.ne.s32.totalorder %s186, %s187
      %p201 = scmp.eq.s32.totalorder %s27, 1
      %p202 = por %p200, %p201
      %p204 = scmp.ne.s32.totalorder %s187, %s203
      %p205 = scmp.eq.s32.totalorder %s27, 0
      %p206 = por %p204, %p205
      %p207 = scmp.le.s32.totalorder 1, %s21
      %p208 = scmp.lt.s32.totalorder %s21, 3
      %p209 = pnand %p207, %p208
      %p210 = pneg %p209
      // Predicated region
      $region9: #{tpu_custom_call.1} parent=5 // pred_check
        _
      $region10: #{tpu_custom_call.1} parent=5 // pred_check_branch
        %212 = sbr.rel (%p209) target = $region12
      $region11: #{tpu_custom_call.1} parent=5 // pred_region
        %s213 = ssub.s32 %s21, 1
        // Predicated region
        $region13: #{tpu_custom_call.1} parent=11 // pred_check
          %p214 = pneg %p68
        $region14: #{tpu_custom_call.1} parent=11 // pred_check_branch
          %216 = sbr.rel (%p214) target = $region16
        $region15: #{tpu_custom_call.1} parent=11 // pred_region
          %s218 = ssub.s32 512, 512
          %219 = vsyncadd [#allocation6], %s218
          %s220 = sshll.u32 [#allocation5], 4
          %s221 = int_to_ptr.vmem [resolvable:$true] %s220
          %226 = dma.hbm_to_vmem [thread:$0]  %s1, 512, %s221, [#allocation6], 128, 128, 8
        $region16: #{tpu_custom_call.1} parent=11 // pred_fallthru
          _
        // Predicated region
        $region17: #{tpu_custom_call.1} parent=11 // pred_check
          %p227 = pneg %p89
        $region18: #{tpu_custom_call.1} parent=11 // pred_check_branch
          %229 = sbr.rel (%p227) target = $region20
        $region19: #{tpu_custom_call.1} parent=11 // pred_region
          %s231 = ssub.s32 512, 512
          %232 = vsyncadd [#allocation6], %s231
          %s233 = sshll.u32 [#allocation7], 4
          %s234 = int_to_ptr.vmem [resolvable:$true] %s233
          %239 = dma.hbm_to_vmem [thread:$0]  %s2, 512, %s234, [#allocation6], 128, 128, 8
        $region20: #{tpu_custom_call.1} parent=11 // pred_fallthru
          _
        // Predicated region
        $region21: #{tpu_custom_call.1} parent=11 // pred_check
          %p240 = pneg %p110
        $region22: #{tpu_custom_call.1} parent=11 // pred_check_branch
          %242 = sbr.rel (%p240) target = $region24
        $region23: #{tpu_custom_call.1} parent=11 // pred_region
          %s244 = ssub.s32 512, 512
          %245 = vsyncadd [#allocation9], %s244
          %s246 = sshll.u32 [#allocation8], 4
          %s247 = int_to_ptr.vmem [resolvable:$true] %s246
          %252 = dma.hbm_to_vmem [thread:$0]  %s3, 512, %s247, [#allocation9], 128, 128, 8
        $region24: #{tpu_custom_call.1} parent=11 // pred_fallthru
          _
        // Predicated region
        $region25: #{tpu_custom_call.1} parent=11 // pred_check
          %p253 = pneg %p131
        $region26: #{tpu_custom_call.1} parent=11 // pred_check_branch
          %255 = sbr.rel (%p253) target = $region28
        $region27: #{tpu_custom_call.1} parent=11 // pred_region
          _
        $region28: #{tpu_custom_call.1} parent=11 // pred_fallthru
          _
        // Predicated region
        $region29: #{tpu_custom_call.1} parent=11 // pred_check
          %p256 = pneg %p152
        $region30: #{tpu_custom_call.1} parent=11 // pred_check_branch
          %258 = sbr.rel (%p256) target = $region32
        $region31: #{tpu_custom_call.1} parent=11 // pred_region
          _
        $region32: #{tpu_custom_call.1} parent=11 // pred_fallthru
          _
        // Predicated region
        $region33: #{tpu_custom_call.1} parent=11 // pred_check
          %p259 = pneg %p173
        $region34: #{tpu_custom_call.1} parent=11 // pred_check_branch
          %261 = sbr.rel (%p259) target = $region36
        $region35: #{tpu_custom_call.1} parent=11 // pred_region
          _
        $region36: #{tpu_custom_call.1} parent=11 // pred_fallthru
          _
      $region12: #{tpu_custom_call.1} parent=5 // pred_fallthru
        _
      %p262 = scmp.lt.s32.totalorder %s21, 2
      // Predicated region
      $region37: #{tpu_custom_call.1} parent=5 // pred_check
        %p263 = pneg %p262
      $region38: #{tpu_custom_call.1} parent=5 // pred_check_branch
        %265 = sbr.rel (%p263) target = $region40
      $region39: #{tpu_custom_call.1} parent=5 // pred_region
        // Predicated region
        $region41: #{tpu_custom_call.1} parent=39 // pred_check
          %p266 = pneg %p41
        $region42: #{tpu_custom_call.1} parent=39 // pred_check_branch
          %268 = sbr.rel (%p266) target = $region44
        $region43: #{tpu_custom_call.1} parent=39 // pred_region
          %s269 = sand.u32 %s31, 1
          %s270 = scalar_lea.sflag [#allocation3], %s269
          %s271 = sand.u32 %s31, 1
          %s272 = smul.addr %s271, 8
          %s273 = scalar_lea.vmem [#allocation2], %s272
          %s275 = ssub.s32 128, 128
          %276 = vsyncadd %s270, %s275
          %s277 = smul.addr %s21, 128
          %s278 = scalar_lea.hbm %s0, %s277
          %s280 = sshll.u32 %s273, 4
          %s281 = int_to_ptr.vmem [resolvable:$true] %s280
          %283 = dma.hbm_to_vmem [thread:$0]  %s278, 128, %s281, %s270
        $region44: #{tpu_custom_call.1} parent=39 // pred_fallthru
          _
      $region40: #{tpu_custom_call.1} parent=5 // pred_fallthru
        _
      %p284 = scmp.le.s32.totalorder 1, %s21
      %p285 = scmp.lt.s32.totalorder %s21, 3
      %p286 = pnand %p284, %p285
      %p287 = pneg %p286
      // Predicated region
      $region45: #{tpu_custom_call.1} parent=5 // pred_check
        _
      $region46: #{tpu_custom_call.1} parent=5 // pred_check_branch
        %289 = sbr.rel (%p286) target = $region48
      $region47: #{tpu_custom_call.1} parent=5 // pred_region
        %s290 = ssub.s32 %s21, 1
        %s291 = sand.u32 %s34, 1
        %s292 = scalar_lea.sflag [#allocation3], %s291
        %s293 = sand.u32 %s34, 1
        %s294 = smul.addr %s293, 8
        %s295 = scalar_lea.vmem [#allocation2], %s294
        // Predicated region
        $region49: #{tpu_custom_call.1} parent=47 // pred_check
          %p296 = pneg %p47
        $region50: #{tpu_custom_call.1} parent=47 // pred_check_branch
          %298 = sbr.rel (%p296) target = $region52
        $region51: #{tpu_custom_call.1} parent=47 // pred_region
          %299 = dma.done %s292, 128
        $region52: #{tpu_custom_call.1} parent=47 // pred_fallthru
          _
        // Predicated region
        $region53: #{tpu_custom_call.1} parent=47 // pred_check
          %p300 = pneg %p68
        $region54: #{tpu_custom_call.1} parent=47 // pred_check_branch
          %302 = sbr.rel (%p300) target = $region56
        $region55: #{tpu_custom_call.1} parent=47 // pred_region
          %303 = dma.done [#allocation6], 512
        $region56: #{tpu_custom_call.1} parent=47 // pred_fallthru
          _
        // Predicated region
        $region57: #{tpu_custom_call.1} parent=47 // pred_check
          %p304 = pneg %p89
        $region58: #{tpu_custom_call.1} parent=47 // pred_check_branch
          %306 = sbr.rel (%p304) target = $region60
        $region59: #{tpu_custom_call.1} parent=47 // pred_region
          %307 = dma.done [#allocation6], 512
        $region60: #{tpu_custom_call.1} parent=47 // pred_fallthru
          _
        // Predicated region
        $region61: #{tpu_custom_call.1} parent=47 // pred_check
          %p308 = pneg %p110
        $region62: #{tpu_custom_call.1} parent=47 // pred_check_branch
          %310 = sbr.rel (%p308) target = $region64
        $region63: #{tpu_custom_call.1} parent=47 // pred_region
          %311 = dma.done [#allocation9], 512
        $region64: #{tpu_custom_call.1} parent=47 // pred_fallthru
          _
        %s312 = sand.u32 %s34, 1
        %s313 = scalar_lea.sflag [#allocation3], %s312
        %s314 = sand.u32 %s34, 1
        %s315 = smul.addr %s314, 8
        %s316 = scalar_lea.vmem [#allocation2], %s315
        %p317 = pneg %p47
        %p318 = pneg %p44
        %p319 = pneg %p68
        %p320 = pneg %p65
        %p321 = pneg %p89
        %p322 = pneg %p86
        %p323 = pneg %p110
        %p324 = pneg %p107
        %p325 = pneg %p131
        %p326 = pneg %p128
        %p327 = pneg %p152
        %p328 = pneg %p149
        %p329 = pneg %p173
        %p330 = pneg %p170
        %p331 = pneg %p199
        %p332 = pneg %p196
        %s333 = sand.u32 %s186, 1
        %s334 = scalar_lea.sflag [#allocation4], %s333
        %s335 = sand.u32 %s186, 1
        %s336 = smul.addr %s335, 8
        %s337 = scalar_lea.vmem [#allocation10], %s336
        %v339 = vld [vmem:[%s295] sm:$0xff]
        %v340 = vpack.c.bf16 %v339, %v339
        %v341 = vld [vmem:[#allocation5] sm:$0xff]
        %v342 = vld [vmem:[#allocation5 + $0x8] sm:$0xff]
        %v343 = vld [vmem:[#allocation5 + $0x10] sm:$0xff]
        %v344 = vld [vmem:[#allocation5 + $0x18] sm:$0xff]
        %v345 = vpack.c.bf16 %v342, %v341
        %v346 = vpack.c.bf16 %v344, %v343
        %v347 = vld [vmem:[%s4] sm:$0x1]
        %v349 = vlaneseq
        %v350 = vshrl.u32 %v349, 7
        %v351 = vsub.s32 0, %v350
        %v352 = vrot.slane %v347, %v351
        %vm354 = vcmask 261120
        %v356 = vsel %vm354, %v340, 0
        %358 = vmatprep.subr.bf16.mxu0 0
        %359 = vmatpush1.bf16.msra.mxu0 %v345
        %360 = vmatprep.subr.bf16.mxu0 0
        %361 = vmatpush1.bf16.msra.mxu0 %v346
        %362 = vmatprep.subr.bf16.mxu0 0
        %363 = vmatpush1.bf16.msra.mxu0 0
        %364 = vmatprep.subr.bf16.mxu0 0
        %365 = vmatpush1.bf16.msra.mxu0 0
        %366 = vmatprep.subr.bf16.mxu0 0
        %367 = vmatpush1.bf16.msra.mxu0 0
        %368 = vmatprep.subr.bf16.mxu0 0
        %369 = vmatpush1.bf16.msra.mxu0 0
        %370 = vmatprep.subr.bf16.mxu0 0
        %371 = vmatpush1.bf16.msra.mxu0 0
        %372 = vmatprep.subr.bf16.mxu0 0
        %373 = vmatpush1.bf16.msra.mxu0 0
        %374 = vmatprep.subr.bf16.mxu0 0
        %375 = vmatpush1.bf16.msra.mxu0 0
        %376 = vmatprep.subr.bf16.mxu0 0
        %377 = vmatpush1.bf16.msra.mxu0 0
        %378 = vmatprep.subr.bf16.mxu0 0
        %379 = vmatpush1.bf16.msra.mxu0 0
        %380 = vmatprep.subr.bf16.mxu0 0
        %381 = vmatpush1.bf16.msra.mxu0 0
        %382 = vmatprep.subr.bf16.mxu0 0
        %383 = vmatpush1.bf16.msra.mxu0 0
        %384 = vmatprep.subr.bf16.mxu0 0
        %385 = vmatpush1.bf16.msra.mxu0 0
        %386 = vmatprep.subr.bf16.mxu0 0
        %387 = vmatpush1.bf16.msra.mxu0 0
        %388 = vmatprep.subr.bf16.mxu0 0
        %389 = vmatpush1.bf16.msra.mxu0 0
        %390 = vmatprep.mubr.bf16.mxu0 0
        %391 = vmatmul.mubr.bf16.gmra.mrb[0].mxu0 %v356
        %v392 = vpop.f32.mrb[0].mxu0
        %v393 = vadd.f32 %v352, %v392
        %v394 = vpop.f32.mrb[0].mxu0
        %v395 = vpop.f32.mrb[0].mxu0
        %v396 = vpop.f32.mrb[0].mxu0
        %397 = vdwg.mxu0
        %v398 = vmul.f32 %v393, 2.828427
        %v399 = vpack.c.bf16 %v398, %v398
        %v400 = vld [vmem:[#allocation7] sm:$0xff]
        %v401 = vld [vmem:[#allocation7 + $0x8] sm:$0xff]
        %v402 = vld [vmem:[#allocation7 + $0x10] sm:$0xff]
        %v403 = vld [vmem:[#allocation7 + $0x18] sm:$0xff]
        %v404 = vpack.c.bf16 %v401, %v400
        %v405 = vpack.c.bf16 %v403, %v402
        %v406 = vld [vmem:[%s5] sm:$0x1]
        %v408 = vlaneseq
        %v409 = vshrl.u32 %v408, 7
        %v410 = vsub.s32 0, %v409
        %v411 = vrot.slane %v406, %v410
        %413 = vmatprep.subr.bf16.mxu0 0
        %414 = vmatpush1.bf16.msra.mxu0 %v404
        %415 = vmatprep.subr.bf16.mxu0 0
        %416 = vmatpush1.bf16.msra.mxu0 %v405
        %417 = vmatprep.subr.bf16.mxu0 0
        %418 = vmatpush1.bf16.msra.mxu0 0
        %419 = vmatprep.subr.bf16.mxu0 0
        %420 = vmatpush1.bf16.msra.mxu0 0
        %421 = vmatprep.subr.bf16.mxu0 0
        %422 = vmatpush1.bf16.msra.mxu0 0
        %423 = vmatprep.subr.bf16.mxu0 0
        %424 = vmatpush1.bf16.msra.mxu0 0
        %425 = vmatprep.subr.bf16.mxu0 0
        %426 = vmatpush1.bf16.msra.mxu0 0
        %427 = vmatprep.subr.bf16.mxu0 0
        %428 = vmatpush1.bf16.msra.mxu0 0
        %429 = vmatprep.subr.bf16.mxu0 0
        %430 = vmatpush1.bf16.msra.mxu0 0
        %431 = vmatprep.subr.bf16.mxu0 0
        %432 = vmatpush1.bf16.msra.mxu0 0
        %433 = vmatprep.subr.bf16.mxu0 0
        %434 = vmatpush1.bf16.msra.mxu0 0
        %435 = vmatprep.subr.bf16.mxu0 0
        %436 = vmatpush1.bf16.msra.mxu0 0
        %437 = vmatprep.subr.bf16.mxu0 0
        %438 = vmatpush1.bf16.msra.mxu0 0
        %439 = vmatprep.subr.bf16.mxu0 0
        %440 = vmatpush1.bf16.msra.mxu0 0
        %441 = vmatprep.subr.bf16.mxu0 0
        %442 = vmatpush1.bf16.msra.mxu0 0
        %443 = vmatprep.subr.bf16.mxu0 0
        %444 = vmatpush1.bf16.msra.mxu0 0
        %445 = vmatprep.mubr.bf16.mxu0 0
        %446 = vmatmul.mubr.bf16.gmra.mrb[0].mxu0 %v356
        %v447 = vpop.f32.mrb[0].mxu0
        %v448 = vadd.f32 %v411, %v447
        %v449 = vpop.f32.mrb[0].mxu0
        %v450 = vpop.f32.mrb[0].mxu0
        %v451 = vpop.f32.mrb[0].mxu0
        %452 = vdwg.mxu0
        %v453 = vpack.c.bf16 %v448, %v448
        %v454 = vld [vmem:[#allocation8] sm:$0xff]
        %v455 = vld [vmem:[#allocation8 + $0x8] sm:$0xff]
        %v456 = vld [vmem:[#allocation8 + $0x10] sm:$0xff]
        %v457 = vld [vmem:[#allocation8 + $0x18] sm:$0xff]
        %v458 = vpack.c.bf16 %v455, %v454
        %v459 = vpack.c.bf16 %v457, %v456
        %v460 = vld [vmem:[%s6] sm:$0x1]
        %v462 = vlaneseq
        %v463 = vshrl.u32 %v462, 7
        %v464 = vsub.s32 0, %v463
        %v465 = vrot.slane %v460, %v464
        %467 = vmatprep.subr.bf16.mxu0 0
        %468 = vmatpush1.bf16.msra.mxu0 %v458
        %469 = vmatprep.subr.bf16.mxu0 0
        %470 = vmatpush1.bf16.msra.mxu0 %v459
        %471 = vmatprep.subr.bf16.mxu0 0
        %472 = vmatpush1.bf16.msra.mxu0 0
        %473 = vmatprep.subr.bf16.mxu0 0
        %474 = vmatpush1.bf16.msra.mxu0 0
        %475 = vmatprep.subr.bf16.mxu0 0
        %476 = vmatpush1.bf16.msra.mxu0 0
        %477 = vmatprep.subr.bf16.mxu0 0
        %478 = vmatpush1.bf16.msra.mxu0 0
        %479 = vmatprep.subr.bf16.mxu0 0
        %480 = vmatpush1.bf16.msra.mxu0 0
        %481 = vmatprep.subr.bf16.mxu0 0
        %482 = vmatpush1.bf16.msra.mxu0 0
        %483 = vmatprep.subr.bf16.mxu0 0
        %484 = vmatpush1.bf16.msra.mxu0 0
        %485 = vmatprep.subr.bf16.mxu0 0
        %486 = vmatpush1.bf16.msra.mxu0 0
        %487 = vmatprep.subr.bf16.mxu0 0
        %488 = vmatpush1.bf16.msra.mxu0 0
        %489 = vmatprep.subr.bf16.mxu0 0
        %490 = vmatpush1.bf16.msra.mxu0 0
        %491 = vmatprep.subr.bf16.mxu0 0
        %492 = vmatpush1.bf16.msra.mxu0 0
        %493 = vmatprep.subr.bf16.mxu0 0
        %494 = vmatpush1.bf16.msra.mxu0 0
        %495 = vmatprep.subr.bf16.mxu0 0
        %496 = vmatpush1.bf16.msra.mxu0 0
        %497 = vmatprep.subr.bf16.mxu0 0
        %498 = vmatpush1.bf16.msra.mxu0 0
        %499 = vmatprep.mubr.bf16.mxu0 0
        %500 = vmatmul.mubr.bf16.gmra.mrb[0].mxu0 %v356
        %v501 = vpop.f32.mrb[0].mxu0
        %v502 = vadd.f32 %v465, %v501
        %v503 = vpop.f32.mrb[0].mxu0
        %v504 = vpop.f32.mrb[0].mxu0
        %v505 = vpop.f32.mrb[0].mxu0
        %506 = vdwg.mxu0
        %v507 = vpack.c.bf16 %v502, %v502
        %vm508 = vcmask 64512
        %v510 = vsel %vm508, %v399, 0
        %v513 = vsel %vm508, %v453, 0
        %515 = vmatprep.subr.bf16.mxu0 0
        %516 = vmatpush1.bf16.xpose.msra.mxu0 %v513
        %517 = vmatprep.subr.bf16.mxu0 0
        %518 = vmatpush1.bf16.xpose.msra.mxu0 0
        %519 = vmatprep.subr.bf16.mxu0 0
        %520 = vmatpush1.bf16.xpose.msra.mxu0 0
        %521 = vmatprep.subr.bf16.mxu0 0
        %522 = vmatpush1.bf16.xpose.msra.mxu0 0
        %523 = vmatprep.subr.bf16.mxu0 0
        %524 = vmatpush1.bf16.xpose.msra.mxu0 0
        %525 = vmatprep.subr.bf16.mxu0 0
        %526 = vmatpush1.bf16.xpose.msra.mxu0 0
        %527 = vmatprep.subr.bf16.mxu0 0
        %528 = vmatpush1.bf16.xpose.msra.mxu0 0
        %529 = vmatprep.subr.bf16.mxu0 0
        %530 = vmatpush1.bf16.xpose.msra.mxu0 0
        %531 = vmatprep.subr.bf16.mxu0 0
        %532 = vmatpush1.bf16.xpose.msra.mxu0 0
        %533 = vmatprep.subr.bf16.mxu0 0
        %534 = vmatpush1.bf16.xpose.msra.mxu0 0
        %535 = vmatprep.subr.bf16.mxu0 0
        %536 = vmatpush1.bf16.xpose.msra.mxu0 0
        %537 = vmatprep.subr.bf16.mxu0 0
        %538 = vmatpush1.bf16.xpose.msra.mxu0 0
        %539 = vmatprep.subr.bf16.mxu0 0
        %540 = vmatpush1.bf16.xpose.msra.mxu0 0
        %541 = vmatprep.subr.bf16.mxu0 0
        %542 = vmatpush1.bf16.xpose.msra.mxu0 0
        %543 = vmatprep.subr.bf16.mxu0 0
        %544 = vmatpush1.bf16.xpose.msra.mxu0 0
        %545 = vmatprep.subr.bf16.mxu0 0
        %546 = vmatpush1.bf16.xpose.msra.mxu0 0
        %547 = vmatprep.mubr.bf16.mxu0 0
        %548 = vmatmul.mubr.bf16.gmra.mrb[0].mxu0 %v510
        %v549 = vpop.f32.mrb[0].mxu0
        %v550 = vadd.f32 0.0, %v549
        %v551 = vpop.f32.mrb[0].mxu0
        %v552 = vpop.f32.mrb[0].mxu0
        %v553 = vpop.f32.mrb[0].mxu0
        %554 = vdwg.mxu0
        %v555 = vsel %vm508, %v550, -inf
        %556 = vmax.xlane.f32.xlu0 %v555
        %v557 = vpop.xlane.xlu0 %556
        %v558 = vsub.f32 %v550, %v557
        %v559 = vmul.f32 %v558, 1.442695
        %v560 = vpow.pop %v559
        %v561 = vsel %vm508, %v560, 0.0
        %562 = vadd.xlane.f32.xlu0 %v561
        %v563 = vpop.xlane.xlu0 %562
        %v564 = vpack.c.bf16 %v560, %v560
        %v566 = vsel %vm508, %v564, 0
        %vm568 = vcmask 1043456
        %v570 = vsel %vm568, %v507, 0
        %572 = vmatprep.subr.bf16.mxu0 0
        %573 = vmatpush1.bf16.msra.mxu0 %v570
        %574 = vmatprep.subr.bf16.mxu0 0
        %575 = vmatpush1.bf16.msra.mxu0 0
        %576 = vmatprep.subr.bf16.mxu0 0
        %577 = vmatpush1.bf16.msra.mxu0 0
        %578 = vmatprep.subr.bf16.mxu0 0
        %579 = vmatpush1.bf16.msra.mxu0 0
        %580 = vmatprep.subr.bf16.mxu0 0
        %581 = vmatpush1.bf16.msra.mxu0 0
        %582 = vmatprep.subr.bf16.mxu0 0
        %583 = vmatpush1.bf16.msra.mxu0 0
        %584 = vmatprep.subr.bf16.mxu0 0
        %585 = vmatpush1.bf16.msra.mxu0 0
        %586 = vmatprep.subr.bf16.mxu0 0
        %587 = vmatpush1.bf16.msra.mxu0 0
        %588 = vmatprep.subr.bf16.mxu0 0
        %589 = vmatpush1.bf16.msra.mxu0 0
        %590 = vmatprep.subr.bf16.mxu0 0
        %591 = vmatpush1.bf16.msra.mxu0 0
        %592 = vmatprep.subr.bf16.mxu0 0
        %593 = vmatpush1.bf16.msra.mxu0 0
        %594 = vmatprep.subr.bf16.mxu0 0
        %595 = vmatpush1.bf16.msra.mxu0 0
        %596 = vmatprep.subr.bf16.mxu0 0
        %597 = vmatpush1.bf16.msra.mxu0 0
        %598 = vmatprep.subr.bf16.mxu0 0
        %599 = vmatpush1.bf16.msra.mxu0 0
        %600 = vmatprep.subr.bf16.mxu0 0
        %601 = vmatpush1.bf16.msra.mxu0 0
        %602 = vmatprep.subr.bf16.mxu0 0
        %603 = vmatpush1.bf16.msra.mxu0 0
        %604 = vmatprep.mubr.bf16.mxu0 0
        %605 = vmatmul.mubr.bf16.gmra.mrb[0].mxu0 %v566
        %v606 = vpop.f32.mrb[0].mxu0
        %v607 = vadd.f32 0.0, %v606
        %v608 = vpop.f32.mrb[0].mxu0
        %v609 = vpop.f32.mrb[0].mxu0
        %v610 = vpop.f32.mrb[0].mxu0
        %611 = vdwg.mxu0
        %v612 = vrcp.pop %v563
        %v613 = vmul.f32 %v607, %v612
        %615 = vrot.lane.b32.xlu0 %v399, 120
        %v616 = vpop.permute.xlu0 %615
        %618 = vrot.lane.b32.xlu0 %v453, 120
        %v619 = vpop.permute.xlu0 %618
        %v621 = vsel %vm508, %v616, 0
        %v624 = vsel %vm508, %v619, 0
        %626 = vmatprep.subr.bf16.mxu0 0
        %627 = vmatpush1.bf16.xpose.msra.mxu0 %v624
        %628 = vmatprep.subr.bf16.mxu0 0
        %629 = vmatpush1.bf16.xpose.msra.mxu0 0
        %630 = vmatprep.subr.bf16.mxu0 0
        %631 = vmatpush1.bf16.xpose.msra.mxu0 0
        %632 = vmatprep.subr.bf16.mxu0 0
        %633 = vmatpush1.bf16.xpose.msra.mxu0 0
        %634 = vmatprep.subr.bf16.mxu0 0
        %635 = vmatpush1.bf16.xpose.msra.mxu0 0
        %636 = vmatprep.subr.bf16.mxu0 0
        %637 = vmatpush1.bf16.xpose.msra.mxu0 0
        %638 = vmatprep.subr.bf16.mxu0 0
        %639 = vmatpush1.bf16.xpose.msra.mxu0 0
        %640 = vmatprep.subr.bf16.mxu0 0
        %641 = vmatpush1.bf16.xpose.msra.mxu0 0
        %642 = vmatprep.subr.bf16.mxu0 0
        %643 = vmatpush1.bf16.xpose.msra.mxu0 0
        %644 = vmatprep.subr.bf16.mxu0 0
        %645 = vmatpush1.bf16.xpose.msra.mxu0 0
        %646 = vmatprep.subr.bf16.mxu0 0
        %647 = vmatpush1.bf16.xpose.msra.mxu0 0
        %648 = vmatprep.subr.bf16.mxu0 0
        %649 = vmatpush1.bf16.xpose.msra.mxu0 0
        %650 = vmatprep.subr.bf16.mxu0 0
        %651 = vmatpush1.bf16.xpose.msra.mxu0 0
        %652 = vmatprep.subr.bf16.mxu0 0
        %653 = vmatpush1.bf16.xpose.msra.mxu0 0
        %654 = vmatprep.subr.bf16.mxu0 0
        %655 = vmatpush1.bf16.xpose.msra.mxu0 0
        %656 = vmatprep.subr.bf16.mxu0 0
        %657 = vmatpush1.bf16.xpose.msra.mxu0 0
        %658 = vmatprep.mubr.bf16.mxu0 0
        %659 = vmatmul.mubr.bf16.gmra.mrb[0].mxu0 %v621
        %v660 = vpop.f32.mrb[0].mxu0
        %v661 = vadd.f32 0.0, %v660
        %v662 = vpop.f32.mrb[0].mxu0
        %v663 = vpop.f32.mrb[0].mxu0
        %v664 = vpop.f32.mrb[0].mxu0
        %665 = vdwg.mxu0
        %v666 = vsel %vm508, %v661, -inf
        %667 = vmax.xlane.f32.xlu0 %v666
        %v668 = vpop.xlane.xlu0 %667
        %v669 = vsub.f32 %v661, %v668
        %v670 = vmul.f32 %v669, 1.442695
        %v671 = vpow.pop %v670
        %v672 = vsel %vm508, %v671, 0.0
        %673 = vadd.xlane.f32.xlu0 %v672
        %v674 = vpop.xlane.xlu0 %673
        %v675 = vpack.c.bf16 %v671, %v671
        %677 = vrot.lane.b32.xlu0 %v507, 120
        %v678 = vpop.permute.xlu0 %677
        %v680 = vsel %vm508, %v675, 0
        %v683 = vsel %vm568, %v678, 0
        %685 = vmatprep.subr.bf16.mxu0 0
        %686 = vmatpush1.bf16.msra.mxu0 %v683
        %687 = vmatprep.subr.bf16.mxu0 0
        %688 = vmatpush1.bf16.msra.mxu0 0
        %689 = vmatprep.subr.bf16.mxu0 0
        %690 = vmatpush1.bf16.msra.mxu0 0
        %691 = vmatprep.subr.bf16.mxu0 0
        %692 = vmatpush1.bf16.msra.mxu0 0
        %693 = vmatprep.subr.bf16.mxu0 0
        %694 = vmatpush1.bf16.msra.mxu0 0
        %695 = vmatprep.subr.bf16.mxu0 0
        %696 = vmatpush1.bf16.msra.mxu0 0
        %697 = vmatprep.subr.bf16.mxu0 0
        %698 = vmatpush1.bf16.msra.mxu0 0
        %699 = vmatprep.subr.bf16.mxu0 0
        %700 = vmatpush1.bf16.msra.mxu0 0
        %701 = vmatprep.subr.bf16.mxu0 0
        %702 = vmatpush1.bf16.msra.mxu0 0
        %703 = vmatprep.subr.bf16.mxu0 0
        %704 = vmatpush1.bf16.msra.mxu0 0
        %705 = vmatprep.subr.bf16.mxu0 0
        %706 = vmatpush1.bf16.msra.mxu0 0
        %707 = vmatprep.subr.bf16.mxu0 0
        %708 = vmatpush1.bf16.msra.mxu0 0
        %709 = vmatprep.subr.bf16.mxu0 0
        %710 = vmatpush1.bf16.msra.mxu0 0
        %711 = vmatprep.subr.bf16.mxu0 0
        %712 = vmatpush1.bf16.msra.mxu0 0
        %713 = vmatprep.subr.bf16.mxu0 0
        %714 = vmatpush1.bf16.msra.mxu0 0
        %715 = vmatprep.subr.bf16.mxu0 0
        %716 = vmatpush1.bf16.msra.mxu0 0
        %717 = vmatprep.mubr.bf16.mxu0 0
        %718 = vmatmul.mubr.bf16.gmra.mrb[0].mxu0 %v680
        %v719 = vpop.f32.mrb[0].mxu0
        %v720 = vadd.f32 0.0, %v719
        %v721 = vpop.f32.mrb[0].mxu0
        %v722 = vpop.f32.mrb[0].mxu0
        %v723 = vpop.f32.mrb[0].mxu0
        %724 = vdwg.mxu0
        %v725 = vrcp.pop %v674
        %v726 = vmul.f32 %v720, %v725
        %727 = vrot.lane.b32.xlu0 %v399, 112
        %v728 = vpop.permute.xlu0 %727
        %729 = vrot.lane.b32.xlu0 %v453, 112
        %v730 = vpop.permute.xlu0 %729
        %v732 = vsel %vm508, %v728, 0
        %v735 = vsel %vm508, %v730, 0
        %737 = vmatprep.subr.bf16.mxu0 0
        %738 = vmatpush1.bf16.xpose.msra.mxu0 %v735
        %739 = vmatprep.subr.bf16.mxu0 0
        %740 = vmatpush1.bf16.xpose.msra.mxu0 0
        %741 = vmatprep.subr.bf16.mxu0 0
        %742 = vmatpush1.bf16.xpose.msra.mxu0 0
        %743 = vmatprep.subr.bf16.mxu0 0
        %744 = vmatpush1.bf16.xpose.msra.mxu0 0
        %745 = vmatprep.subr.bf16.mxu0 0
        %746 = vmatpush1.bf16.xpose.msra.mxu0 0
        %747 = vmatprep.subr.bf16.mxu0 0
        %748 = vmatpush1.bf16.xpose.msra.mxu0 0
        %749 = vmatprep.subr.bf16.mxu0 0
        %750 = vmatpush1.bf16.xpose.msra.mxu0 0
        %751 = vmatprep.subr.bf16.mxu0 0
        %752 = vmatpush1.bf16.xpose.msra.mxu0 0
        %753 = vmatprep.subr.bf16.mxu0 0
        %754 = vmatpush1.bf16.xpose.msra.mxu0 0
        %755 = vmatprep.subr.bf16.mxu0 0
        %756 = vmatpush1.bf16.xpose.msra.mxu0 0
        %757 = vmatprep.subr.bf16.mxu0 0
        %758 = vmatpush1.bf16.xpose.msra.mxu0 0
        %759 = vmatprep.subr.bf16.mxu0 0
        %760 = vmatpush1.bf16.xpose.msra.mxu0 0
        %761 = vmatprep.subr.bf16.mxu0 0
        %762 = vmatpush1.bf16.xpose.msra.mxu0 0
        %763 = vmatprep.subr.bf16.mxu0 0
        %764 = vmatpush1.bf16.xpose.msra.mxu0 0
        %765 = vmatprep.subr.bf16.mxu0 0
        %766 = vmatpush1.bf16.xpose.msra.mxu0 0
        %767 = vmatprep.subr.bf16.mxu0 0
        %768 = vmatpush1.bf16.xpose.msra.mxu0 0
        %769 = vmatprep.mubr.bf16.mxu0 0
        %770 = vmatmul.mubr.bf16.gmra.mrb[0].mxu0 %v732
        %v771 = vpop.f32.mrb[0].mxu0
        %v772 = vadd.f32 0.0, %v771
        %v773 = vpop.f32.mrb[0].mxu0
        %v774 = vpop.f32.mrb[0].mxu0
        %v775 = vpop.f32.mrb[0].mxu0
        %776 = vdwg.mxu0
        %v777 = vsel %vm508, %v772, -inf
        %778 = vmax.xlane.f32.xlu0 %v777
        %v779 = vpop.xlane.xlu0 %778
        %v780 = vsub.f32 %v772, %v779
        %v781 = vmul.f32 %v780, 1.442695
        %v782 = vpow.pop %v781
        %v783 = vsel %vm508, %v782, 0.0
        %784 = vadd.xlane.f32.xlu0 %v783
        %v785 = vpop.xlane.xlu0 %784
        %v786 = vpack.c.bf16 %v782, %v782
        %787 = vrot.lane.b32.xlu0 %v507, 112
        %v788 = vpop.permute.xlu0 %787
        %v790 = vsel %vm508, %v786, 0
        %v793 = vsel %vm568, %v788, 0
        %795 = vmatprep.subr.bf16.mxu0 0
        %796 = vmatpush1.bf16.msra.mxu0 %v793
        %797 = vmatprep.subr.bf16.mxu0 0
        %798 = vmatpush1.bf16.msra.mxu0 0
        %799 = vmatprep.subr.bf16.mxu0 0
        %800 = vmatpush1.bf16.msra.mxu0 0
        %801 = vmatprep.subr.bf16.mxu0 0
        %802 = vmatpush1.bf16.msra.mxu0 0
        %803 = vmatprep.subr.bf16.mxu0 0
        %804 = vmatpush1.bf16.msra.mxu0 0
        %805 = vmatprep.subr.bf16.mxu0 0
        %806 = vmatpush1.bf16.msra.mxu0 0
        %807 = vmatprep.subr.bf16.mxu0 0
        %808 = vmatpush1.bf16.msra.mxu0 0
        %809 = vmatprep.subr.bf16.mxu0 0
        %810 = vmatpush1.bf16.msra.mxu0 0
        %811 = vmatprep.subr.bf16.mxu0 0
        %812 = vmatpush1.bf16.msra.mxu0 0
        %813 = vmatprep.subr.bf16.mxu0 0
        %814 = vmatpush1.bf16.msra.mxu0 0
        %815 = vmatprep.subr.bf16.mxu0 0
        %816 = vmatpush1.bf16.msra.mxu0 0
        %817 = vmatprep.subr.bf16.mxu0 0
        %818 = vmatpush1.bf16.msra.mxu0 0
        %819 = vmatprep.subr.bf16.mxu0 0
        %820 = vmatpush1.bf16.msra.mxu0 0
        %821 = vmatprep.subr.bf16.mxu0 0
        %822 = vmatpush1.bf16.msra.mxu0 0
        %823 = vmatprep.subr.bf16.mxu0 0
        %824 = vmatpush1.bf16.msra.mxu0 0
        %825 = vmatprep.subr.bf16.mxu0 0
        %826 = vmatpush1.bf16.msra.mxu0 0
        %827 = vmatprep.mubr.bf16.mxu0 0
        %828 = vmatmul.mubr.bf16.gmra.mrb[0].mxu0 %v790
        %v829 = vpop.f32.mrb[0].mxu0
        %v830 = vadd.f32 0.0, %v829
        %v831 = vpop.f32.mrb[0].mxu0
        %v832 = vpop.f32.mrb[0].mxu0
        %v833 = vpop.f32.mrb[0].mxu0
        %834 = vdwg.mxu0
        %v835 = vrcp.pop %v785
        %v836 = vmul.f32 %v830, %v835
        %837 = vrot.lane.b32.xlu0 %v399, 104
        %v838 = vpop.permute.xlu0 %837
        %839 = vrot.lane.b32.xlu0 %v453, 104
        %v840 = vpop.permute.xlu0 %839
        %v842 = vsel %vm508, %v838, 0
        %v845 = vsel %vm508, %v840, 0
        %847 = vmatprep.subr.bf16.mxu0 0
        %848 = vmatpush1.bf16.xpose.msra.mxu0 %v845
        %849 = vmatprep.subr.bf16.mxu0 0
        %850 = vmatpush1.bf16.xpose.msra.mxu0 0
        %851 = vmatprep.subr.bf16.mxu0 0
        %852 = vmatpush1.bf16.xpose.msra.mxu0 0
        %853 = vmatprep.subr.bf16.mxu0 0
        %854 = vmatpush1.bf16.xpose.msra.mxu0 0
        %855 = vmatprep.subr.bf16.mxu0 0
        %856 = vmatpush1.bf16.xpose.msra.mxu0 0
        %857 = vmatprep.subr.bf16.mxu0 0
        %858 = vmatpush1.bf16.xpose.msra.mxu0 0
        %859 = vmatprep.subr.bf16.mxu0 0
        %860 = vmatpush1.bf16.xpose.msra.mxu0 0
        %861 = vmatprep.subr.bf16.mxu0 0
        %862 = vmatpush1.bf16.xpose.msra.mxu0 0
        %863 = vmatprep.subr.bf16.mxu0 0
        %864 = vmatpush1.bf16.xpose.msra.mxu0 0
        %865 = vmatprep.subr.bf16.mxu0 0
        %866 = vmatpush1.bf16.xpose.msra.mxu0 0
        %867 = vmatprep.subr.bf16.mxu0 0
        %868 = vmatpush1.bf16.xpose.msra.mxu0 0
        %869 = vmatprep.subr.bf16.mxu0 0
        %870 = vmatpush1.bf16.xpose.msra.mxu0 0
        %871 = vmatprep.subr.bf16.mxu0 0
        %872 = vmatpush1.bf16.xpose.msra.mxu0 0
        %873 = vmatprep.subr.bf16.mxu0 0
        %874 = vmatpush1.bf16.xpose.msra.mxu0 0
        %875 = vmatprep.subr.bf16.mxu0 0
        %876 = vmatpush1.bf16.xpose.msra.mxu0 0
        %877 = vmatprep.subr.bf16.mxu0 0
        %878 = vmatpush1.bf16.xpose.msra.mxu0 0
        %879 = vmatprep.mubr.bf16.mxu0 0
        %880 = vmatmul.mubr.bf16.gmra.mrb[0].mxu0 %v842
        %v881 = vpop.f32.mrb[0].mxu0
        %v882 = vadd.f32 0.0, %v881
        %v883 = vpop.f32.mrb[0].mxu0
        %v884 = vpop.f32.mrb[0].mxu0
        %v885 = vpop.f32.mrb[0].mxu0
        %886 = vdwg.mxu0
        %v887 = vsel %vm508, %v882, -inf
        %888 = vmax.xlane.f32.xlu0 %v887
        %v889 = vpop.xlane.xlu0 %888
        %v890 = vsub.f32 %v882, %v889
        %v891 = vmul.f32 %v890, 1.442695
        %v892 = vpow.pop %v891
        %v893 = vsel %vm508, %v892, 0.0
        %894 = vadd.xlane.f32.xlu0 %v893
        %v895 = vpop.xlane.xlu0 %894
        %v896 = vpack.c.bf16 %v892, %v892
        %897 = vrot.lane.b32.xlu0 %v507, 104
        %v898 = vpop.permute.xlu0 %897
        %v900 = vsel %vm508, %v896, 0
        %v903 = vsel %vm568, %v898, 0
        %905 = vmatprep.subr.bf16.mxu0 0
        %906 = vmatpush1.bf16.msra.mxu0 %v903
        %907 = vmatprep.subr.bf16.mxu0 0
        %908 = vmatpush1.bf16.msra.mxu0 0
        %909 = vmatprep.subr.bf16.mxu0 0
        %910 = vmatpush1.bf16.msra.mxu0 0
        %911 = vmatprep.subr.bf16.mxu0 0
        %912 = vmatpush1.bf16.msra.mxu0 0
        %913 = vmatprep.subr.bf16.mxu0 0
        %914 = vmatpush1.bf16.msra.mxu0 0
        %915 = vmatprep.subr.bf16.mxu0 0
        %916 = vmatpush1.bf16.msra.mxu0 0
        %917 = vmatprep.subr.bf16.mxu0 0
        %918 = vmatpush1.bf16.msra.mxu0 0
        %919 = vmatprep.subr.bf16.mxu0 0
        %920 = vmatpush1.bf16.msra.mxu0 0
        %921 = vmatprep.subr.bf16.mxu0 0
        %922 = vmatpush1.bf16.msra.mxu0 0
        %923 = vmatprep.subr.bf16.mxu0 0
        %924 = vmatpush1.bf16.msra.mxu0 0
        %925 = vmatprep.subr.bf16.mxu0 0
        %926 = vmatpush1.bf16.msra.mxu0 0
        %927 = vmatprep.subr.bf16.mxu0 0
        %928 = vmatpush1.bf16.msra.mxu0 0
        %929 = vmatprep.subr.bf16.mxu0 0
        %930 = vmatpush1.bf16.msra.mxu0 0
        %931 = vmatprep.subr.bf16.mxu0 0
        %932 = vmatpush1.bf16.msra.mxu0 0
        %933 = vmatprep.subr.bf16.mxu0 0
        %934 = vmatpush1.bf16.msra.mxu0 0
        %935 = vmatprep.subr.bf16.mxu0 0
        %936 = vmatpush1.bf16.msra.mxu0 0
        %937 = vmatprep.mubr.bf16.mxu0 0
        %938 = vmatmul.mubr.bf16.gmra.mrb[0].mxu0 %v900
        %v939 = vpop.f32.mrb[0].mxu0
        %v940 = vadd.f32 0.0, %v939
        %v941 = vpop.f32.mrb[0].mxu0
        %v942 = vpop.f32.mrb[0].mxu0
        %v943 = vpop.f32.mrb[0].mxu0
        %944 = vdwg.mxu0
        %v945 = vrcp.pop %v895
        %v946 = vmul.f32 %v940, %v945
        %948 = vrot.lane.b32.xlu0 %v726, 8
        %v949 = vpop.permute.xlu0 %948
        %952 = vrot.lane.b32.xlu0 %v836, 16
        %v953 = vpop.permute.xlu0 %952
        %956 = vrot.lane.b32.xlu0 %v946, 24
        %v957 = vpop.permute.xlu0 %956
        %v959 = vsel %vm508, %v613, %v949
        %vm960 = vcmask 130048
        %v961 = vsel %vm960, %v959, %v953
        %vm962 = vcmask 195584
        %v963 = vsel %vm962, %v961, %v957
        %964 = vst.msk [vmem:[%s337] sm:$0xff] %vm354, %v963
        %s965 = sand.u32 %s186, 1
        %s966 = scalar_lea.sflag [#allocation4], %s965
        %s967 = sand.u32 %s186, 1
        %s968 = smul.addr %s967, 8
        %s969 = scalar_lea.vmem [#allocation10], %s968
        // Predicated region
        $region65: #{tpu_custom_call.1} parent=47 // pred_check
          %p970 = pneg %p196
        $region66: #{tpu_custom_call.1} parent=47 // pred_check_branch
          %972 = sbr.rel (%p970) target = $region68
        $region67: #{tpu_custom_call.1} parent=47 // pred_region
          %s974 = ssub.s32 128, 128
          %975 = vsyncadd %s966, %s974
          %s976 = smul.addr %s26, 128
          %s977 = scalar_lea.hbm %s7, %s976
          %s979 = sshll.u32 %s969, 4
          %s980 = int_to_ptr.vmem [resolvable:$true] %s979
          %982 = dma.vmem_to_hbm [thread:$0]  %s980, 128, %s977, %s966
        $region68: #{tpu_custom_call.1} parent=47 // pred_fallthru
          _
      $region48: #{tpu_custom_call.1} parent=5 // pred_fallthru
        _
      %p983 = scmp.le.s32.totalorder 2, %s21
      // Predicated region
      $region69: #{tpu_custom_call.1} parent=5 // pred_check
        %p984 = pneg %p983
      $region70: #{tpu_custom_call.1} parent=5 // pred_check_branch
        %986 = sbr.rel (%p984) target = $region72
      $region71: #{tpu_custom_call.1} parent=5 // pred_region
        %s987 = ssub.s32 %s21, 2
        // Predicated region
        $region73: #{tpu_custom_call.1} parent=71 // pred_check
          %p988 = pneg %p202
        $region74: #{tpu_custom_call.1} parent=71 // pred_check_branch
          %990 = sbr.rel (%p988) target = $region76
        $region75: #{tpu_custom_call.1} parent=71 // pred_region
          %s991 = sand.u32 %s187, 1
          %s992 = scalar_lea.sflag [#allocation4], %s991
          %s993 = sand.u32 %s187, 1
          %s994 = smul.addr %s993, 8
          %s995 = scalar_lea.vmem [#allocation10], %s994
          %996 = dma.done %s992, 128
        $region76: #{tpu_custom_call.1} parent=71 // pred_fallthru
          _
      $region72: #{tpu_custom_call.1} parent=5 // pred_fallthru
        _
    $region6: #{tpu_custom_call.1} parent=1 // loop_footer
      %s25 = sadd.s32 1, %s21
    $region7: #{tpu_custom_call.1} parent=1 // loop_footer_branch
      %20 = sbr.rel target = $region3
    $region8: #{tpu_custom_call.1} parent=1 // loop_exit
      _
    %997 = vsyncpa [#allocation3], 1
    %s998 = scalar_lea.sflag [#allocation3], 1
    %999 = vsyncpa %s998, 1
    %1000 = vsyncpa [#allocation6], 1
    %1001 = vsyncpa [#allocation9], 1
    %1002 = vsyncpa [#allocation4], 1
    %s1003 = scalar_lea.sflag [#allocation4], 1
    %1004 = vsyncpa %s1003, 1

</llo_original>
